<compile_context>
chip_gen: v6e
topology: v6e:2x2x1
jax: 0.10.0
libtpu: 0.0.40
codegen_flags: <defaults>
</compile_context>

<pallas_src>
import functools

import jax
import jax.numpy as jnp
from jax.experimental import pallas as pl
from jax.experimental.pallas import tpu as pltpu


def _vmem_budget_bytes():
    """Scoped-VMEM limit derived from the chip generation (v7x has 64 MiB
    physical vs 128 MiB on v5e/v6e)."""
    try:
        cap = int(pltpu.get_tpu_info().vmem_capacity_bytes)
    except Exception:  # query unavailable -> conservative default
        cap = 64 * 1024 * 1024
    return min(cap // 2, 64 * 1024 * 1024)


def _pick_batch_tile(B, G, m, vmem_limit, min_grid_steps=4):
    """Batch tile TB: large enough to amortize the ~0.35us/step overhead,
    small enough that ~7 live tiles (double-buffered in/out + in-kernel
    temporaries) fit the VMEM limit, and capped so the grid keeps at least
    `min_grid_steps` steps (v7x megacore + DMA/compute pipelining)."""
    per_sample = G * m * 4                              # one f32 sample row-block
    tile_target = max(per_sample, vmem_limit // 12)
    tb = int(max(1, min(B, tile_target // per_sample)))
    tb = min(tb, max(1, B // min_grid_steps))
    return max(1, tb)


def _stats_kernel(x_ref, sig_ref, *, inv_m):
    # x block: (TB, G, m).  Writes only the (TB, G, G) covariance; the mean is
    # recomputed in kernel 2 instead of being round-tripped through HBM.
    x = x_ref[...].astype(jnp.float32)
    mean = jnp.mean(x, axis=-1, keepdims=True)                        # (TB, G, 1)
    # Keep the centered formulation (safer vs cancellation than E[xx^T]-mu mu^T).
    xm = x - mean
    sigma = jax.lax.dot_general(                                       # MXU, (TB, G, G)
        xm, xm,
        dimension_numbers=(((2,), (2,)), ((0,), (0,))),
        preferred_element_type=jnp.float32) * inv_m
    sig_ref[...] = sigma.astype(sig_ref.dtype)


def _whiten_affine_kernel(wm_ref, x_ref, w_ref, b_ref, o_ref):
    # Re-center in-kernel (free under DMA), whiten with a TB-batched (G x G)
    # matmul on the MXU, then one fused multiply-add against the lane-aligned
    # (G, m) affine maps.  Single lane-dense store of the full tile.
    x = x_ref[...].astype(jnp.float32)                                 # (TB, G, m)
    xm = x - jnp.mean(x, axis=-1, keepdims=True)
    y = jax.lax.dot_general(                                           # (TB, G, m)
        wm_ref[...], xm,
        dimension_numbers=(((2,), (1,)), ((0,), (0,))),
        preferred_element_type=jnp.float32)
    out = y * w_ref[...][None] + b_ref[...][None]
    o_ref[...] = out.astype(o_ref.dtype)


def instance_group_svd(x, weight, bias, num_groups, eps=1e-5):
    """Forward pass of InstanceGroupSVD.  x: (B, C, L)."""
    B, C, L = x.shape
    G = min(num_groups, C)
    assert C % G == 0
    cpg = C // G
    m = cpg * L
    xg = x.reshape(B, G, m)                       # row-major reshape, free

    vmem_limit = _vmem_budget_bytes()
    TB = _pick_batch_tile(B, G, m, vmem_limit)
    Bp = int(pl.cdiv(B, TB)) * TB
    if Bp != B:                                   # pad awkward batch sizes (never TB=1 collapse)
        xg = jnp.pad(xg, ((0, Bp - B), (0, 0), (0, 0)))
    grid = (Bp // TB,)

    cparams = pltpu.CompilerParams(
        dimension_semantics=("parallel",),        # samples independent -> both TCs on v7x
        vmem_limit_bytes=vmem_limit)

    # ---- Pallas kernel 1: per-sample (G x G) covariance ----
    sigma = pl.pallas_call(
        functools.partial(_stats_kernel, inv_m=1.0 / m),
        grid=grid,
        in_specs=[pl.BlockSpec((TB, G, m), lambda i: (i, 0, 0))],
        out_specs=pl.BlockSpec((TB, G, G), lambda i: (i, 0, 0)),
        out_shape=jax.ShapeDtypeStruct((Bp, G, G), jnp.float32),
        compiler_params=cparams,
    )(xg)

    # ---- glue: batched eigendecomposition of the tiny symmetric PSD sigma ----
    # eigh == SVD for symmetric PSD matrices (wm is invariant to eigenvalue
    # order / eigenvector sign) and is much cheaper on TPU than batched SVD.
    # TODO(synk): no Pallas TPU eig/SVD primitive; computed in plain JAX.
    eig, u = jnp.linalg.eigh(sigma)                        # (Bp, G), (Bp, G, G)
    scale = jax.lax.rsqrt(jnp.maximum(eig, 0.0) + eps)     # clamp only guards PSD roundoff
    wm = jnp.einsum('bik,bk,bjk->bij', u, scale, u)        # U diag(scale) U^T

    # Affine params expanded once on the host to lane-aligned (G, m) maps
    # (a few KiB in HBM, fetched with a constant block index).
    w_map = jnp.broadcast_to(weight.reshape(G, cpg, 1).astype(jnp.float32),
                             (G, cpg, L)).reshape(G, m)
    b_map = jnp.broadcast_to(bias.reshape(G, cpg, 1).astype(jnp.float32),
                             (G, cpg, L)).reshape(G, m)

    # ---- Pallas kernel 2: re-center + whitening matmul + fused affine ----
    y = pl.pallas_call(
        _whiten_affine_kernel,
        grid=grid,
        in_specs=[pl.BlockSpec((TB, G, G), lambda i: (i, 0, 0)),
                  pl.BlockSpec((TB, G, m), lambda i: (i, 0, 0)),
                  pl.BlockSpec((G, m), lambda i: (0, 0)),
                  pl.BlockSpec((G, m), lambda i: (0, 0))],
        out_specs=pl.BlockSpec((TB, G, m), lambda i: (i, 0, 0)),
        out_shape=jax.ShapeDtypeStruct((Bp, G, m), x.dtype),
        compiler_params=cparams,
    )(wm.astype(jnp.float32), xg, w_map, b_map)

    return y[:B].reshape(B, C, L)


def _reference(x, weight, bias, num_groups, eps=1e-5):
    """Plain-JAX reference mirroring the PyTorch forward exactly (SVD path)."""
    B, C, L = x.shape
    G = min(num_groups, C)
    m = (C // G) * L
    xg = x.reshape(B, G, m)
    mean = xg.mean(-1, keepdims=True)
    xm = xg - mean
    sigma = jnp.einsum('bgm,bhm->bgh', xm, xm) / m
    u, eig, _ = jnp.linalg.svd(sigma)
    wm = jnp.einsum('bik,bk,bjk->bij', u, 1.0 / jnp.sqrt(eig + eps), u)
    y = jnp.einsum('bgh,bhm->bgm', wm, xm).reshape(B, C, L)
    return y * weight.reshape(1, C, 1) + bias.reshape(1, C, 1)


if __name__ == "__main__":
    # InstanceGroupSVD(num_features=32, num_groups=8, dim=3, affine=True)
    B, C, L = 4, 32, 64
    num_groups = 8
    eps = 1e-5

    key = jax.random.PRNGKey(0)
    kx, kw, kb = jax.random.split(key, 3)
    x = jax.random.normal(kx, (B, C, L), dtype=jnp.float32)

    # reset_parameters() gives ones/zeros; use deterministic random affine
    # params so the (1,C,1) -> grouped (G,m) broadcast path is exercised.
    weight = jax.random.normal(kw, (1, C, 1), dtype=jnp.float32)
    bias = jax.random.normal(kb, (1, C, 1), dtype=jnp.float32)

    out = instance_group_svd(x, weight, bias, num_groups, eps)
    out = jax.block_until_ready(out)

    ref = jax.block_until_ready(_reference(x, weight, bias, num_groups, eps))
    assert out.shape == (B, C, L)
    assert jnp.max(jnp.abs(out - ref)) < 2e-3, "mismatch vs plain-JAX reference"

    print("KERNEL_OK")
</pallas_src>

<mosaic_0001>
module attributes {stable_mosaic.version = 11 : i64} {
  func.func @_stats_kernel(%arg0: i32, %arg1: memref<1x8x256xf32, #tpu.memory_space<vmem>>, %arg2: memref<1x8x8xf32, #tpu.memory_space<vmem>>) attributes {dimension_semantics = [#tpu.dimension_semantics<parallel>], iteration_bounds = array<i64: 4>, scalar_prefetch = 0 : i64, scratch_operands = 0 : i64, tpu.core_type = #tpu.core_type<tc>, window_params = [{transform_indices = @transform_0, window_bounds = array<i64: 1, 8, 256>}, {transform_indices = @transform_1, window_bounds = array<i64: 1, 8, 8>}]} {
    %c0 = arith.constant 0 : index
    %c0_0 = arith.constant 0 : index
    %c0_1 = arith.constant 0 : index
    %0 = vector.load %arg1[%c0, %c0_0, %c0_1] : memref<1x8x256xf32, #tpu.memory_space<vmem>>, vector<1x8x256xf32>
    %cst = arith.constant dense<0.000000e+00> : vector<1x8xf32>
    %1 = vector.multi_reduction <add>, %0, %cst [2] : vector<1x8x256xf32> to vector<1x8xf32>
    %2 = vector.shape_cast %1 : vector<1x8xf32> to vector<1x8x1xf32>
    %cst_2 = arith.constant 2.560000e+02 : f32
    %3 = vector.broadcast %cst_2 : f32 to vector<1x8x1xf32>
    %4 = arith.divf %2, %3 : vector<1x8x1xf32>
    %5 = vector.broadcast %4 : vector<1x8x1xf32> to vector<1x8x256xf32>
    %6 = arith.subf %0, %5 : vector<1x8x256xf32>
    %cst_3 = arith.constant dense<0.000000e+00> : vector<1x8x8xf32>
    %7 = tpu.matmul %6, %6, %cst_3 {dimension_numbers = #tpu.dot_dimension_numbers<[2], [2], [1], [1], [0, 0, 0, 1, 1, 1], [0], [0]>} : vector<1x8x256xf32>, vector<1x8x256xf32>, vector<1x8x8xf32> -> vector<1x8x8xf32>
    %cst_4 = arith.constant 3.906250e-03 : f32
    %8 = vector.broadcast %cst_4 : f32 to vector<1x8x8xf32>
    %9 = arith.mulf %7, %8 : vector<1x8x8xf32>
    %c0_5 = arith.constant 0 : index
    %c0_6 = arith.constant 0 : index
    %c0_7 = arith.constant 0 : index
    %10 = vector.load %arg2[%c0_5, %c0_6, %c0_7] : memref<1x8x8xf32, #tpu.memory_space<vmem>>, vector<1x8x8xf32>
    tpu.vector_store %arg2[%c0_5, %c0_6, %c0_7], %9 {strides = array<i32>} : memref<1x8x8xf32, #tpu.memory_space<vmem>>, vector<1x8x8xf32>,
    return
  }
  func.func @transform_0(%arg0: i32) -> (i32, i32, i32) {
    %c0_i32 = arith.constant 0 : i32
    %c0_i32_0 = arith.constant 0 : i32
    %c0_i32_1 = arith.constant 0 : i32
    return %arg0, %c0_i32, %c0_i32_0 : i32, i32, i32
  }
  func.func @transform_1(%arg0: i32) -> (i32, i32, i32) {
    %c0_i32 = arith.constant 0 : i32
    %c0_i32_0 = arith.constant 0 : i32
    %c0_i32_1 = arith.constant 0 : i32
    return %arg0, %c0_i32, %c0_i32_0 : i32, i32, i32
  }
}

</mosaic_0001>

<llo_original>
// kernel: tpu_custom_call.1
$region0: #{tpu_custom_call.1}
  #allocation0 [shape = 'u32[]', space=smem, size = 0x4, offset = 0x4, fixed_abs, tag = 'smem constant byte address 0x4 - core index']
  #allocation1 [shape = 'u32[144,128]{1,0:T(1,128)}', space=vmem, size = 0x12000, scoped, tag = 'internal scratch']
  %s0 = inlined_call_operand.hbm [shape: f32[4,8,256], index: 0, kind: input, shape index: {}]
  %s1 = inlined_call_operand.hbm [shape: f32[4,8,8], index: 1, kind: output, shape index: {}]
  %s2 = sld [smem:[#allocation0]]
  $region41: #{tpu_custom_call.1} parent=0
    _
  %s4 = ssub.s32 1, %s2
  %s5 = scalar_select 0, %s4, %s2
  $region1: #{tpu_custom_call.1} parent=0
    #allocation2 [shape = 'u8[16384]{0}', space=vmem, size = 0x4000, scoped, tag = 'input window, operand 0']
    #allocation3 [shape = 's32[2]{0}', space=sflag, size = 0x8, scoped, tag = 'scoped memory for tpu_custom_call.1']
    #allocation4 [shape = 's32[2]{0}', space=sflag, size = 0x8, scoped, tag = 'scoped memory for tpu_custom_call.1']
    #allocation5 [shape = 'u8[8192]{0}', space=vmem, size = 0x2000, scoped, tag = 'output window, operand 0']
    %6 = vsyncpa [#allocation3], 0
    %s7 = scalar_lea.sflag [#allocation3], 1
    %8 = vsyncpa %s7, 0
    %9 = vsyncpa [#allocation4], 0
    %s10 = scalar_lea.sflag [#allocation4], 1
    %11 = vsyncpa %s10, 0
    loop: start=0, step=1, limit=6
    $region2: #{tpu_custom_call.1} parent=1 // loop_pre_header
      _
    $region3: #{tpu_custom_call.1} parent=1 // loop_header
      %s13 = sphi 0, %s17
      %p14 = scmp.ge.s32.totalorder %s13, 6
      %s23 = sphi 0, %s25
      %s26 = sphi 0, %s23
      %s27 = sphi 0, %s26
      %s43 = sphi 0, %s27
      %s49 = sphi 0, %s51
      %s52 = sphi 0, %s49
      %s53 = sphi 0, %s52
      %s69 = sphi 0, %s53
    $region4: #{tpu_custom_call.1} parent=1 // loop_header_branch
      %16 = sbr.rel (%p14) target = $region8
    $region5: #{tpu_custom_call.1} parent=1 // loop_body
      %s18 = ssub.s32 %s13, 1
      %s19 = ssub.s32 %s13, 2
      %s20 = sadd.s32 %s13, 1
      %s21 = ssub.s32 %s13, %s20
      %p22 = scmp.eq.s32.totalorder %s21, 0
      %s24 = sadd.s32 %s23, 1
      %s25 = scalar_select %p22, %s23, %s24
      %p28 = pneg %p22
      %p29 = scmp.eq.s32.totalorder %s13, 3
      %p30 = por %p28, %p29
      %p31 = scmp.ne.s32.totalorder %s23, %s26
      %p32 = scmp.eq.s32.totalorder %s13, 0
      %p33 = por %p31, %p32
      %p34 = scmp.ne.s32.totalorder %s23, %s26
      %p35 = scmp.eq.s32.totalorder %s18, 3
      %p36 = por %p34, %p35
      %p37 = scmp.ne.s32.totalorder %s26, %s27
      %p38 = scmp.eq.s32.totalorder %s18, 0
      %p39 = por %p37, %p38
      %p40 = scmp.ne.s32.totalorder %s26, %s27
      %p41 = scmp.eq.s32.totalorder %s19, 3
      %p42 = por %p40, %p41
      %p44 = scmp.ne.s32.totalorder %s27, %s43
      %p45 = scmp.eq.s32.totalorder %s19, 0
      %p46 = por %p44, %p45
      %s47 = ssub.s32 %s13, %s20
      %p48 = scmp.eq.s32.totalorder %s47, 0
      %s50 = sadd.s32 %s49, 1
      %s51 = scalar_select %p48, %s49, %s50
      %p54 = pneg %p48
      %p55 = scmp.eq.s32.totalorder %s13, 3
      %p56 = por %p54, %p55
      %p57 = scmp.ne.s32.totalorder %s49, %s52
      %p58 = scmp.eq.s32.totalorder %s13, 0
      %p59 = por %p57, %p58
      %p60 = scmp.ne.s32.totalorder %s49, %s52
      %p61 = scmp.eq.s32.totalorder %s18, 3
      %p62 = por %p60, %p61
      %p63 = scmp.ne.s32.totalorder %s52, %s53
      %p64 = scmp.eq.s32.totalorder %s18, 0
      %p65 = por %p63, %p64
      %p66 = scmp.ne.s32.totalorder %s52, %s53
      %p67 = scmp.eq.s32.totalorder %s19, 3
      %p68 = por %p66, %p67
      %p70 = scmp.ne.s32.totalorder %s53, %s69
      %p71 = scmp.eq.s32.totalorder %s19, 0
      %p72 = por %p70, %p71
      %p73 = scmp.le.s32.totalorder 1, %s13
      %p74 = scmp.lt.s32.totalorder %s13, 5
      %p75 = pnand %p73, %p74
      %p76 = pneg %p75
      // Predicated region
      $region9: #{tpu_custom_call.1} parent=5 // pred_check
        _
      $region10: #{tpu_custom_call.1} parent=5 // pred_check_branch
        %78 = sbr.rel (%p75) target = $region12
      $region11: #{tpu_custom_call.1} parent=5 // pred_region
        %s79 = ssub.s32 %s13, 1
      $region12: #{tpu_custom_call.1} parent=5 // pred_fallthru
        _
      %p80 = scmp.lt.s32.totalorder %s13, 4
      // Predicated region
      $region13: #{tpu_custom_call.1} parent=5 // pred_check
        %p81 = pneg %p80
      $region14: #{tpu_custom_call.1} parent=5 // pred_check_branch
        %83 = sbr.rel (%p81) target = $region16
      $region15: #{tpu_custom_call.1} parent=5 // pred_region
        // Predicated region
        $region17: #{tpu_custom_call.1} parent=15 // pred_check
          %p84 = pneg %p33
        $region18: #{tpu_custom_call.1} parent=15 // pred_check_branch
          %86 = sbr.rel (%p84) target = $region20
        $region19: #{tpu_custom_call.1} parent=15 // pred_region
          %s87 = sand.u32 %s23, 1
          %s88 = scalar_lea.sflag [#allocation3], %s87
          %s89 = sand.u32 %s23, 1
          %s90 = smul.addr %s89, 16
          %s91 = scalar_lea.vmem [#allocation2], %s90
          %s93 = ssub.s32 256, 256
          %94 = vsyncadd %s88, %s93
          %s95 = smul.addr %s13, 2
          %s96 = smul.addr %s95, 128
          %s97 = scalar_lea.hbm %s0, %s96
          %s99 = sshll.u32 %s91, 4
          %s100 = int_to_ptr.vmem [resolvable:$true] %s99
          %102 = dma.hbm_to_vmem [thread:$0]  %s97, 256, %s100, %s88
        $region20: #{tpu_custom_call.1} parent=15 // pred_fallthru
          _
      $region16: #{tpu_custom_call.1} parent=5 // pred_fallthru
        _
      %p103 = scmp.le.s32.totalorder 1, %s13
      %p104 = scmp.lt.s32.totalorder %s13, 5
      %p105 = pnand %p103, %p104
      %p106 = pneg %p105
      // Predicated region
      $region21: #{tpu_custom_call.1} parent=5 // pred_check
        _
      $region22: #{tpu_custom_call.1} parent=5 // pred_check_branch
        %108 = sbr.rel (%p105) target = $region24
      $region23: #{tpu_custom_call.1} parent=5 // pred_region
        %s109 = ssub.s32 %s13, 1
        %s110 = sand.u32 %s26, 1
        %s111 = scalar_lea.sflag [#allocation3], %s110
        %s112 = sand.u32 %s26, 1
        %s113 = smul.addr %s112, 16
        %s114 = scalar_lea.vmem [#allocation2], %s113
        // Predicated region
        $region25: #{tpu_custom_call.1} parent=23 // pred_check
          %p115 = pneg %p39
        $region26: #{tpu_custom_call.1} parent=23 // pred_check_branch
          %117 = sbr.rel (%p115) target = $region28
        $region27: #{tpu_custom_call.1} parent=23 // pred_region
          %118 = dma.done %s111, 256
        $region28: #{tpu_custom_call.1} parent=23 // pred_fallthru
          _
        %s119 = sand.u32 %s26, 1
        %s120 = scalar_lea.sflag [#allocation3], %s119
        %s121 = sand.u32 %s26, 1
        %s122 = smul.addr %s121, 16
        %s123 = scalar_lea.vmem [#allocation2], %s122
        %p124 = pneg %p39
        %p125 = pneg %p36
        %p126 = pneg %p65
        %p127 = pneg %p62
        %s128 = sand.u32 %s52, 1
        %s129 = scalar_lea.sflag [#allocation4], %s128
        %s130 = sand.u32 %s52, 1
        %s131 = smul.addr %s130, 8
        %s132 = scalar_lea.vmem [#allocation5], %s131
        %v133 = vld [vmem:[%s114] sm:$0xff]
        %v134 = vld [vmem:[%s114 + $0x8] sm:$0xff]
        %v135 = vadd.f32 %v133, %v134
        %136 = vadd.xlane.f32.xlu0 %v135
        %v137 = vpop.xlane.xlu0 %136
        %v138 = vrcp.pop 256.0
        %v139 = vmul.f32 %v137, %v138
        %v140 = vsub.f32 %v133, %v139
        %v141 = vsub.f32 %v134, %v139
        %142 = vmatprep.subr.mxu0 0.0
        %143 = vmatpush1.xpose.msra.mxu0 0.0
        %144 = vmatprep.subr.mxu0 0.0
        %145 = vmatpush1.xpose.msra.mxu0 0.0
        %146 = vmatprep.subr.mxu0 0.0
        %147 = vmatpush1.xpose.msra.mxu0 0.0
        %148 = vmatprep.subr.mxu0 0.0
        %149 = vmatpush1.xpose.msra.mxu0 0.0
        %150 = vmatprep.subr.mxu0 0.0
        %151 = vmatpush1.xpose.msra.mxu0 0.0
        %152 = vmatprep.subr.mxu0 0.0
        %153 = vmatpush1.xpose.msra.mxu0 0.0
        %154 = vmatprep.subr.mxu0 0.0
        %155 = vmatpush1.xpose.msra.mxu0 0.0
        %156 = vmatprep.subr.mxu0 0.0
        %157 = vmatpush1.xpose.msra.mxu0 0.0
        %158 = vmatprep.subr.mxu0 0.0
        %159 = vmatpush1.xpose.msra.mxu0 0.0
        %160 = vmatprep.subr.mxu0 0.0
        %161 = vmatpush1.xpose.msra.mxu0 0.0
        %162 = vmatprep.subr.mxu0 0.0
        %163 = vmatpush1.xpose.msra.mxu0 0.0
        %164 = vmatprep.subr.mxu0 0.0
        %165 = vmatpush1.xpose.msra.mxu0 0.0
        %166 = vmatprep.subr.mxu0 0.0
        %167 = vmatpush1.xpose.msra.mxu0 0.0
        %168 = vmatprep.subr.mxu0 0.0
        %169 = vmatpush1.xpose.msra.mxu0 0.0
        %170 = vmatprep.subr.mxu0 0.0
        %171 = vmatpush1.xpose.msra.mxu0 0.0
        %172 = vmatprep.subr.mxu0 %v141
        %173 = vmatpush1.xpose.msra.mxu0 %v140
        %174 = vmatprep.subr.mxu0 0.0
        %175 = vmatpush2.xpose.msra.mxu0 0.0
        %176 = vmatprep.subr.mxu0 0.0
        %177 = vmatpush2.xpose.msra.mxu0 0.0
        %178 = vmatprep.subr.mxu0 0.0
        %179 = vmatpush2.xpose.msra.mxu0 0.0
        %180 = vmatprep.subr.mxu0 0.0
        %181 = vmatpush2.xpose.msra.mxu0 0.0
        %182 = vmatprep.subr.mxu0 0.0
        %183 = vmatpush2.xpose.msra.mxu0 0.0
        %184 = vmatprep.subr.mxu0 0.0
        %185 = vmatpush2.xpose.msra.mxu0 0.0
        %186 = vmatprep.subr.mxu0 0.0
        %187 = vmatpush2.xpose.msra.mxu0 0.0
        %188 = vmatprep.subr.mxu0 0.0
        %189 = vmatpush2.xpose.msra.mxu0 0.0
        %190 = vmatprep.subr.mxu0 0.0
        %191 = vmatpush2.xpose.msra.mxu0 0.0
        %192 = vmatprep.subr.mxu0 0.0
        %193 = vmatpush2.xpose.msra.mxu0 0.0
        %194 = vmatprep.subr.mxu0 0.0
        %195 = vmatpush2.xpose.msra.mxu0 0.0
        %196 = vmatprep.subr.mxu0 0.0
        %197 = vmatpush2.xpose.msra.mxu0 0.0
        %198 = vmatprep.subr.mxu0 0.0
        %199 = vmatpush2.xpose.msra.mxu0 0.0
        %200 = vmatprep.subr.mxu0 0.0
        %201 = vmatpush2.xpose.msra.mxu0 0.0
        %202 = vmatprep.subr.mxu0 0.0
        %203 = vmatpush2.xpose.msra.mxu0 0.0
        %204 = vmatprep.subr.mxu0 0.0
        %205 = vmatpush2.xpose.msra.mxu0 0.0
        %206 = vmatprep.mubr.f32.mxu0 %v141
        %207 = vmatmul.mubr.f32.gmra.mxu0 %v140
        %v208 = vpop.f32.mrf.mxu0
        %v209 = vadd.f32 0.0, %v208
        %v210 = vpop.f32.mrf.mxu0
        %211 = vdwg.mxu0
        %v212 = vmul.f32 %v209, 0.00390625
        %vm213 = vcmask 64512
        %214 = vst.msk [vmem:[%s132] sm:$0xff] %vm213, %v212
        %s215 = sand.u32 %s52, 1
        %s216 = scalar_lea.sflag [#allocation4], %s215
        %s217 = sand.u32 %s52, 1
        %s218 = smul.addr %s217, 8
        %s219 = scalar_lea.vmem [#allocation5], %s218
        // Predicated region
        $region29: #{tpu_custom_call.1} parent=23 // pred_check
          %p220 = pneg %p62
        $region30: #{tpu_custom_call.1} parent=23 // pred_check_branch
          %222 = sbr.rel (%p220) target = $region32
        $region31: #{tpu_custom_call.1} parent=23 // pred_region
          %s224 = ssub.s32 128, 128
          %225 = vsyncadd %s216, %s224
          %s226 = smul.addr %s18, 128
          %s227 = scalar_lea.hbm %s1, %s226
          %s229 = sshll.u32 %s219, 4
          %s230 = int_to_ptr.vmem [resolvable:$true] %s229
          %232 = dma.vmem_to_hbm [thread:$0]  %s230, 128, %s227, %s216
        $region32: #{tpu_custom_call.1} parent=23 // pred_fallthru
          _
      $region24: #{tpu_custom_call.1} parent=5 // pred_fallthru
        _
      %p233 = scmp.le.s32.totalorder 2, %s13
      // Predicated region
      $region33: #{tpu_custom_call.1} parent=5 // pred_check
        %p234 = pneg %p233
      $region34: #{tpu_custom_call.1} parent=5 // pred_check_branch
        %236 = sbr.rel (%p234) target = $region36
      $region35: #{tpu_custom_call.1} parent=5 // pred_region
        %s237 = ssub.s32 %s13, 2
        // Predicated region
        $region37: #{tpu_custom_call.1} parent=35 // pred_check
          %p238 = pneg %p68
        $region38: #{tpu_custom_call.1} parent=35 // pred_check_branch
          %240 = sbr.rel (%p238) target = $region40
        $region39: #{tpu_custom_call.1} parent=35 // pred_region
          %s241 = sand.u32 %s53, 1
          %s242 = scalar_lea.sflag [#allocation4], %s241
          %s243 = sand.u32 %s53, 1
          %s244 = smul.addr %s243, 8
          %s245 = scalar_lea.vmem [#allocation5], %s244
          %246 = dma.done %s242, 128
        $region40: #{tpu_custom_call.1} parent=35 // pred_fallthru
          _
      $region36: #{tpu_custom_call.1} parent=5 // pred_fallthru
        _
    $region6: #{tpu_custom_call.1} parent=1 // loop_footer
      %s17 = sadd.s32 1, %s13
    $region7: #{tpu_custom_call.1} parent=1 // loop_footer_branch
      %12 = sbr.rel target = $region3
    $region8: #{tpu_custom_call.1} parent=1 // loop_exit
      _
    %247 = vsyncpa [#allocation3], 1
    %s248 = scalar_lea.sflag [#allocation3], 1
    %249 = vsyncpa %s248, 1
    %250 = vsyncpa [#allocation4], 1
    %s251 = scalar_lea.sflag [#allocation4], 1
    %252 = vsyncpa %s251, 1

</llo_original>
